<compile_context>
chip_gen: v7x
topology: tpu7x:2x2x1
jax: 0.10.0
libtpu: 0.0.40
codegen_flags: <defaults>
</compile_context>

<pallas_src>
import jax
import jax.numpy as jnp
from jax.experimental import pallas as pl
from jax.experimental.pallas import tpu as pltpu


# --------------------------------------------------------------------------
# Kernel
# --------------------------------------------------------------------------
def autoencoder_kernel(x_ref,
                       w1_ref, b1_ref,
                       w23_ref, b23_ref,
                       w4_ref, b4_ref,
                       out_ref):
    mxu_dtype = w1_ref.dtype            # bf16 (default) or f32
    x = x_ref[...]

    # ---- encoder layer 1 ----
    h1 = jnp.dot(x.astype(mxu_dtype), w1_ref[...],
                 preferred_element_type=jnp.float32) + b1_ref[...]
    h1 = jnp.maximum(h1, 0.0)
    # TODO(synk): nn.Dropout(0.2) is a no-op at inference; training-mode dropout not implemented.

    # ---- fused encoder layer 2 + decoder layer 1 (W23 = W2 @ W3) ----
    h2 = jnp.dot(h1.astype(mxu_dtype), w23_ref[...],
                 preferred_element_type=jnp.float32) + b23_ref[...]
    h2 = jnp.maximum(h2, 0.0)

    # ---- decoder output layer ----
    logits = jnp.dot(h2.astype(mxu_dtype), w4_ref[...],
                     preferred_element_type=jnp.float32) + b4_ref[...]
    out_ref[...] = jax.nn.sigmoid(logits)


# --------------------------------------------------------------------------
# Wrapper
# --------------------------------------------------------------------------
def _prep_params(params, matmul_dtype):
    """Fuse W2@W3 / b2@W3+b3 in f32 (HIGHEST precision), then cast matmul
    weights to `matmul_dtype`.  Biases stay f32 for the VPU adds."""
    w23 = jnp.dot(params["w2"], params["w3"],
                  precision=jax.lax.Precision.HIGHEST)
    b23 = (jnp.dot(params["b2"], params["w3"],
                   precision=jax.lax.Precision.HIGHEST)
           + params["b3"]).astype(jnp.float32)
    return {
        "w1": params["w1"].astype(matmul_dtype),
        "b1": params["b1"].astype(jnp.float32),
        "w23": w23.astype(matmul_dtype),
        "b23": b23,
        "w4": params["w4"].astype(matmul_dtype),
        "b4": params["b4"].astype(jnp.float32),
    }


def _pick_batch_tile(B, tile_b):
    """Large tile to amortize per-step overhead, multiple of 8 (sublanes),
    but small enough that the grid has >=2 steps (v7x megacore) when B allows."""
    if B <= 16:
        return B                         # one step; nothing to shard/amortize
    half = -(-B // 2)                    # cdiv(B, 2)
    half = ((half + 7) // 8) * 8         # round up to sublane multiple
    return min(tile_b, half)


def autoencoder_forward(x, params, *, tile_b=2048, matmul_dtype=jnp.bfloat16):
    """x: [B, input_dim] float32; params: dict of (already-transposed, [in,out])
    weights and [1,out] biases.  Batch is tiled into (TB, D) blocks; weights
    stay VMEM-resident across grid steps via constant index_maps."""
    B, D = x.shape
    p = _prep_params(params, matmul_dtype)

    TB = _pick_batch_tile(B, tile_b)
    grid = (pl.cdiv(B, TB),)

    def resident(arr):  # constant index_map -> VMEM-resident across grid steps
        return pl.BlockSpec(arr.shape, lambda i: (0,) * arr.ndim)

    batch_spec = pl.BlockSpec((TB, D), lambda i: (i, 0))

    return pl.pallas_call(
        autoencoder_kernel,
        out_shape=jax.ShapeDtypeStruct((B, D), jnp.float32),
        grid=grid,
        in_specs=[batch_spec,
                  resident(p["w1"]), resident(p["b1"]),
                  resident(p["w23"]), resident(p["b23"]),
                  resident(p["w4"]), resident(p["b4"])],
        out_specs=batch_spec,
        compiler_params=pltpu.CompilerParams(
            dimension_semantics=("parallel",),
            vmem_limit_bytes=32 * 1024 * 1024,
        ),
    )(x, p["w1"], p["b1"], p["w23"], p["b23"], p["w4"], p["b4"])


# --------------------------------------------------------------------------
# Params + pure-JAX reference (PyTorch eval semantics)
# --------------------------------------------------------------------------
def init_params(key, input_dim, embedding_dim, hidden=256):
    """Deterministic synthetic parameters.  Weights stored as [in, out]
    (transpose of nn.Linear's layout); biases as [1, out]."""
    keys = jax.random.split(key, 8)
    scale = 0.05

    def w(k, fan_in, fan_out):
        return (scale * jax.random.normal(k, (fan_in, fan_out))).astype(jnp.float32)

    def b(k, fan_out):
        return (scale * jax.random.normal(k, (1, fan_out))).astype(jnp.float32)

    return {
        "w1": w(keys[0], input_dim, hidden),     "b1": b(keys[1], hidden),
        "w2": w(keys[2], hidden, embedding_dim), "b2": b(keys[3], embedding_dim),
        "w3": w(keys[4], embedding_dim, hidden), "b3": b(keys[5], hidden),
        "w4": w(keys[6], hidden, input_dim),     "b4": b(keys[7], input_dim),
    }


def reference_forward(x, p):
    h1 = jnp.maximum(x @ p["w1"] + p["b1"], 0.0)
    z = h1 @ p["w2"] + p["b2"]
    h2 = jnp.maximum(z @ p["w3"] + p["b3"], 0.0)
    return jax.nn.sigmoid(h2 @ p["w4"] + p["b4"])


# --------------------------------------------------------------------------
# Self-test
# --------------------------------------------------------------------------
if __name__ == "__main__":
    input_dim = 128
    embedding_dim = 32

    key = jax.random.PRNGKey(0)
    kx, kp, kx2 = jax.random.split(key, 3)
    params = init_params(kp, input_dim, embedding_dim)

    # --- small batch: single grid step ---
    batch = 8
    x = jax.random.normal(kx, (batch, input_dim), dtype=jnp.float32)
    ref = reference_forward(x, params)

    # Exact-f32 path: proves the W2@W3 fusion is numerically faithful.
    out_f32 = jax.block_until_ready(
        autoencoder_forward(x, params, matmul_dtype=jnp.float32))
    assert out_f32.shape == (batch, input_dim)
    assert jnp.allclose(out_f32, ref, atol=1e-5, rtol=1e-4), \
        float(jnp.max(jnp.abs(out_f32 - ref)))

    # Default bf16-MXU path: f32 accumulation, looser tolerance per review.
    out_bf16 = jax.block_until_ready(autoencoder_forward(x, params))
    assert out_bf16.shape == (batch, input_dim)
    assert jnp.allclose(out_bf16, ref, atol=2e-2, rtol=2e-2), \
        float(jnp.max(jnp.abs(out_bf16 - ref)))

    # --- larger batch: 2-step pipelined grid (TB = 512), so the "parallel"
    #     batch axis can actually be split across v7x's two TensorCores ---
    batch2 = 1024
    x2 = jax.random.normal(kx2, (batch2, input_dim), dtype=jnp.float32)
    ref2 = reference_forward(x2, params)

    out2 = jax.block_until_ready(autoencoder_forward(x2, params))
    assert out2.shape == (batch2, input_dim)
    assert jnp.allclose(out2, ref2, atol=2e-2, rtol=2e-2)

    out2_f32 = jax.block_until_ready(
        autoencoder_forward(x2, params, matmul_dtype=jnp.float32))
    assert jnp.allclose(out2_f32, ref2, atol=1e-5, rtol=1e-4)

    print("KERNEL_OK")
</pallas_src>

<mosaic_0001>
module attributes {stable_mosaic.version = 11 : i64} {
  func.func @autoencoder_kernel(%arg0: i32, %arg1: memref<8x128xf32, #tpu.memory_space<vmem>>, %arg2: memref<128x256xf32, #tpu.memory_space<vmem>>, %arg3: memref<1x256xf32, #tpu.memory_space<vmem>>, %arg4: memref<256x256xf32, #tpu.memory_space<vmem>>, %arg5: memref<1x256xf32, #tpu.memory_space<vmem>>, %arg6: memref<256x128xf32, #tpu.memory_space<vmem>>, %arg7: memref<1x128xf32, #tpu.memory_space<vmem>>, %arg8: memref<8x128xf32, #tpu.memory_space<vmem>>) attributes {dimension_semantics = [#tpu.dimension_semantics<parallel>], iteration_bounds = array<i64: 1>, scalar_prefetch = 0 : i64, scratch_operands = 0 : i64, tpu.core_type = #tpu.core_type<tc>, window_params = [{transform_indices = @transform_0, window_bounds = array<i64: 8, 128>}, {pipeline_mode = #tpu.pipeline_mode<synchronous>, transform_indices = @transform_1, window_bounds = array<i64: 128, 256>}, {pipeline_mode = #tpu.pipeline_mode<synchronous>, transform_indices = @transform_2, window_bounds = array<i64: 1, 256>}, {pipeline_mode = #tpu.pipeline_mode<synchronous>, transform_indices = @transform_3, window_bounds = array<i64: 256, 256>}, {pipeline_mode = #tpu.pipeline_mode<synchronous>, transform_indices = @transform_4, window_bounds = array<i64: 1, 256>}, {pipeline_mode = #tpu.pipeline_mode<synchronous>, transform_indices = @transform_5, window_bounds = array<i64: 256, 128>}, {pipeline_mode = #tpu.pipeline_mode<synchronous>, transform_indices = @transform_6, window_bounds = array<i64: 1, 128>}, {transform_indices = @transform_7, window_bounds = array<i64: 8, 128>}]} {
    %c0 = arith.constant 0 : index
    %c0_0 = arith.constant 0 : index
    %0 = vector.load %arg1[%c0, %c0_0] : memref<8x128xf32, #tpu.memory_space<vmem>>, vector<8x128xf32>
    %c0_1 = arith.constant 0 : index
    %c0_2 = arith.constant 0 : index
    %1 = vector.load %arg2[%c0_1, %c0_2] : memref<128x256xf32, #tpu.memory_space<vmem>>, vector<128x256xf32>
    %cst = arith.constant dense<0.000000e+00> : vector<8x256xf32>
    %2 = tpu.matmul %0, %1, %cst {dimension_numbers = #tpu.dot_dimension_numbers<[1], [0], [0], [1], [0, 0, 1, 1], [], []>} : vector<8x128xf32>, vector<128x256xf32>, vector<8x256xf32> -> vector<8x256xf32>
    %c0_3 = arith.constant 0 : index
    %c0_4 = arith.constant 0 : index
    %3 = vector.load %arg3[%c0_3, %c0_4] : memref<1x256xf32, #tpu.memory_space<vmem>>, vector<1x256xf32>
    %4 = vector.broadcast %3 : vector<1x256xf32> to vector<8x256xf32>
    %5 = arith.addf %2, %4 : vector<8x256xf32>
    %cst_5 = arith.constant 0.000000e+00 : f32
    %6 = vector.broadcast %cst_5 : f32 to vector<8x256xf32>
    %7 = arith.maximumf %5, %6 : vector<8x256xf32>
    %c0_6 = arith.constant 0 : index
    %c0_7 = arith.constant 0 : index
    %8 = vector.load %arg4[%c0_6, %c0_7] : memref<256x256xf32, #tpu.memory_space<vmem>>, vector<256x256xf32>
    %cst_8 = arith.constant dense<0.000000e+00> : vector<8x256xf32>
    %9 = tpu.matmul %7, %8, %cst_8 {dimension_numbers = #tpu.dot_dimension_numbers<[1], [0], [0], [1], [0, 0, 1, 1], [], []>} : vector<8x256xf32>, vector<256x256xf32>, vector<8x256xf32> -> vector<8x256xf32>
    %c0_9 = arith.constant 0 : index
    %c0_10 = arith.constant 0 : index
    %10 = vector.load %arg5[%c0_9, %c0_10] : memref<1x256xf32, #tpu.memory_space<vmem>>, vector<1x256xf32>
    %11 = vector.broadcast %10 : vector<1x256xf32> to vector<8x256xf32>
    %12 = arith.addf %9, %11 : vector<8x256xf32>
    %cst_11 = arith.constant 0.000000e+00 : f32
    %13 = vector.broadcast %cst_11 : f32 to vector<8x256xf32>
    %14 = arith.maximumf %12, %13 : vector<8x256xf32>
    %c0_12 = arith.constant 0 : index
    %c0_13 = arith.constant 0 : index
    %15 = vector.load %arg6[%c0_12, %c0_13] : memref<256x128xf32, #tpu.memory_space<vmem>>, vector<256x128xf32>
    %cst_14 = arith.constant dense<0.000000e+00> : vector<8x128xf32>
    %16 = tpu.matmul %14, %15, %cst_14 {dimension_numbers = #tpu.dot_dimension_numbers<[1], [0], [0], [1], [0, 0, 1, 1], [], []>} : vector<8x256xf32>, vector<256x128xf32>, vector<8x128xf32> -> vector<8x128xf32>
    %c0_15 = arith.constant 0 : index
    %c0_16 = arith.constant 0 : index
    %17 = vector.load %arg7[%c0_15, %c0_16] : memref<1x128xf32, #tpu.memory_space<vmem>>, vector<1x128xf32>
    %18 = vector.broadcast %17 : vector<1x128xf32> to vector<8x128xf32>
    %19 = arith.addf %16, %18 : vector<8x128xf32>
    %20 = arith.negf %19 : vector<8x128xf32>
    %21 = math.exp %20 : vector<8x128xf32>
    %cst_17 = arith.constant 1.000000e+00 : f32
    %22 = vector.broadcast %cst_17 : f32 to vector<8x128xf32>
    %23 = arith.addf %22, %21 : vector<8x128xf32>
    %24 = arith.divf %22, %23 : vector<8x128xf32>
    %c0_18 = arith.constant 0 : index
    %c0_19 = arith.constant 0 : index
    %25 = vector.load %arg8[%c0_18, %c0_19] : memref<8x128xf32, #tpu.memory_space<vmem>>, vector<8x128xf32>
    tpu.vector_store %arg8[%c0_18, %c0_19], %24 {strides = array<i32>} : memref<8x128xf32, #tpu.memory_space<vmem>>, vector<8x128xf32>,
    return
  }
  func.func @transform_0(%arg0: i32) -> (i32, i32) {
    %c0_i32 = arith.constant 0 : i32
    %c0_i32_0 = arith.constant 0 : i32
    return %arg0, %c0_i32 : i32, i32
  }
  func.func @transform_1(%arg0: i32) -> (i32, i32) {
    %c0_i32 = arith.constant 0 : i32
    %c0_i32_0 = arith.constant 0 : i32
    %c0_i32_1 = arith.constant 0 : i32
    return %c0_i32, %c0_i32_0 : i32, i32
  }
  func.func @transform_2(%arg0: i32) -> (i32, i32) {
    %c0_i32 = arith.constant 0 : i32
    %c0_i32_0 = arith.constant 0 : i32
    %c0_i32_1 = arith.constant 0 : i32
    return %c0_i32, %c0_i32_0 : i32, i32
  }
  func.func @transform_3(%arg0: i32) -> (i32, i32) {
    %c0_i32 = arith.constant 0 : i32
    %c0_i32_0 = arith.constant 0 : i32
    %c0_i32_1 = arith.constant 0 : i32
    return %c0_i32, %c0_i32_0 : i32, i32
  }
  func.func @transform_4(%arg0: i32) -> (i32, i32) {
    %c0_i32 = arith.constant 0 : i32
    %c0_i32_0 = arith.constant 0 : i32
    %c0_i32_1 = arith.constant 0 : i32
    return %c0_i32, %c0_i32_0 : i32, i32
  }
  func.func @transform_5(%arg0: i32) -> (i32, i32) {
    %c0_i32 = arith.constant 0 : i32
    %c0_i32_0 = arith.constant 0 : i32
    %c0_i32_1 = arith.constant 0 : i32
    return %c0_i32, %c0_i32_0 : i32, i32
  }
  func.func @transform_6(%arg0: i32) -> (i32, i32) {
    %c0_i32 = arith.constant 0 : i32
    %c0_i32_0 = arith.constant 0 : i32
    %c0_i32_1 = arith.constant 0 : i32
    return %c0_i32, %c0_i32_0 : i32, i32
  }
  func.func @transform_7(%arg0: i32) -> (i32, i32) {
    %c0_i32 = arith.constant 0 : i32
    %c0_i32_0 = arith.constant 0 : i32
    return %arg0, %c0_i32 : i32, i32
  }
}

</mosaic_0001>

<llo_original>
// kernel: tpu_custom_call.1
$region0: #{tpu_custom_call.1}
  #allocation0 [shape = 'u32[]', space=smem, size = 0x4, offset = 0x4, fixed_abs, tag = 'smem constant byte address 0x4 - core index']
  #allocation1 [shape = 'u32[144,128]{1,0:T(1,128)}', space=vmem, size = 0x12000, scoped, tag = 'internal scratch']
  %s0 = inlined_call_operand.hbm [shape: f32[8,128], index: 0, kind: input, shape index: {}]
  %s1 = inlined_call_operand.hbm [shape: f32[128,256], index: 1, kind: input, shape index: {}]
  %s2 = inlined_call_operand.vmem [shape: f32[1,256], index: 2, kind: input, shape index: {}]
  %s3 = inlined_call_operand.hbm [shape: f32[256,256], index: 3, kind: input, shape index: {}]
  %s4 = inlined_call_operand.vmem [shape: f32[1,256], index: 4, kind: input, shape index: {}]
  %s5 = inlined_call_operand.hbm [shape: f32[256,128], index: 5, kind: input, shape index: {}]
  %s6 = inlined_call_operand.vmem [shape: f32[1,128], index: 6, kind: input, shape index: {}]
  %s7 = inlined_call_operand.hbm [shape: f32[8,128], index: 7, kind: output, shape index: {}]
  %s8 = sld [smem:[#allocation0]]
  $region54: #{tpu_custom_call.1} parent=0
    _
  %s10 = ssub.s32 1, %s8
  %s11 = scalar_select 0, %s10, %s8
  $region1: #{tpu_custom_call.1} parent=0
    #allocation2 [shape = 'u8[4096]{0}', space=vmem, size = 0x1000, scoped, tag = 'input window, operand 0, single buffered']
    #allocation3 [shape = 's32[1]{0}', space=sflag, size = 0x4, scoped, tag = 'scoped memory for tpu_custom_call.1']
    #allocation4 [shape = 's32[1]{0}', space=sflag, size = 0x4, scoped, tag = 'scoped memory for tpu_custom_call.1']
    #allocation5 [shape = 'u8[131072]{0}', space=vmem, size = 0x20000, scoped, tag = 'input window, operand 1, single buffered']
    #allocation6 [shape = 's32[1]{0}', space=sflag, size = 0x4, scoped, tag = 'scoped memory for tpu_custom_call.1']
    #allocation7 [shape = 'u8[262144]{0}', space=vmem, size = 0x40000, scoped, tag = 'input window, operand 3, single buffered']
    #allocation8 [shape = 'u8[131072]{0}', space=vmem, size = 0x20000, scoped, tag = 'input window, operand 5, single buffered']
    #allocation9 [shape = 's32[1]{0}', space=sflag, size = 0x4, scoped, tag = 'scoped memory for tpu_custom_call.1']
    #allocation10 [shape = 'u8[4096]{0}', space=vmem, size = 0x1000, scoped, tag = 'output window, operand 0, single buffered']
    %12 = vsyncpa [#allocation3], 0
    %13 = vsyncpa [#allocation6], 0
    %14 = vsyncpa [#allocation9], 0
    %15 = vsyncpa [#allocation4], 0
    // Predicated region
    $region2: #{tpu_custom_call.1} parent=1 // pred_check
      _
    $region3: #{tpu_custom_call.1} parent=1 // pred_check_branch
      %17 = sbr.rel (0) target = $region5
    $region4: #{tpu_custom_call.1} parent=1 // pred_region
      %s19 = ssub.s32 128, 128
      %20 = vsyncadd [#allocation3], %s19
      %s22 = sshll.u32 [#allocation2], 4
      %s23 = int_to_ptr.vmem [resolvable:$true] %s22
      %25 = dma.hbm_to_vmem [thread:$0]  %s0, 128, %s23, [#allocation3]
    $region5: #{tpu_custom_call.1} parent=1 // pred_fallthru
      _
    // Predicated region
    $region6: #{tpu_custom_call.1} parent=1 // pred_check
      _
    $region7: #{tpu_custom_call.1} parent=1 // pred_check_branch
      %27 = sbr.rel (0) target = $region9
    $region8: #{tpu_custom_call.1} parent=1 // pred_region
      %s29 = ssub.s32 4096, 4096
      %30 = vsyncadd [#allocation6], %s29
      %s31 = sshll.u32 [#allocation5], 4
      %s32 = int_to_ptr.vmem [resolvable:$true] %s31
      %37 = dma.hbm_to_vmem [thread:$0]  %s1, 4096, %s32, [#allocation6], 256, 256, 16
    $region9: #{tpu_custom_call.1} parent=1 // pred_fallthru
      _
    // Predicated region
    $region10: #{tpu_custom_call.1} parent=1 // pred_check
      _
    $region11: #{tpu_custom_call.1} parent=1 // pred_check_branch
      %39 = sbr.rel (0) target = $region13
    $region12: #{tpu_custom_call.1} parent=1 // pred_region
      _
    $region13: #{tpu_custom_call.1} parent=1 // pred_fallthru
      _
    // Predicated region
    $region14: #{tpu_custom_call.1} parent=1 // pred_check
      _
    $region15: #{tpu_custom_call.1} parent=1 // pred_check_branch
      %41 = sbr.rel (0) target = $region17
    $region16: #{tpu_custom_call.1} parent=1 // pred_region
      %s43 = ssub.s32 8192, 8192
      %44 = vsyncadd [#allocation6], %s43
      %s45 = sshll.u32 [#allocation7], 4
      %s46 = int_to_ptr.vmem [resolvable:$true] %s45
      %51 = dma.hbm_to_vmem [thread:$0]  %s3, 8192, %s46, [#allocation6], 256, 256, 16
    $region17: #{tpu_custom_call.1} parent=1 // pred_fallthru
      _
    // Predicated region
    $region18: #{tpu_custom_call.1} parent=1 // pred_check
      _
    $region19: #{tpu_custom_call.1} parent=1 // pred_check_branch
      %53 = sbr.rel (0) target = $region21
    $region20: #{tpu_custom_call.1} parent=1 // pred_region
      _
    $region21: #{tpu_custom_call.1} parent=1 // pred_fallthru
      _
    // Predicated region
    $region22: #{tpu_custom_call.1} parent=1 // pred_check
      _
    $region23: #{tpu_custom_call.1} parent=1 // pred_check_branch
      %55 = sbr.rel (0) target = $region25
    $region24: #{tpu_custom_call.1} parent=1 // pred_region
      %s57 = ssub.s32 4096, 4096
      %58 = vsyncadd [#allocation9], %s57
      %s59 = sshll.u32 [#allocation8], 4
      %s60 = int_to_ptr.vmem [resolvable:$true] %s59
      %65 = dma.hbm_to_vmem [thread:$0]  %s5, 4096, %s60, [#allocation9], 128, 128, 8
    $region25: #{tpu_custom_call.1} parent=1 // pred_fallthru
      _
    // Predicated region
    $region26: #{tpu_custom_call.1} parent=1 // pred_check
      _
    $region27: #{tpu_custom_call.1} parent=1 // pred_check_branch
      %67 = sbr.rel (0) target = $region29
    $region28: #{tpu_custom_call.1} parent=1 // pred_region
      _
    $region29: #{tpu_custom_call.1} parent=1 // pred_fallthru
      _
    // Predicated region
    $region30: #{tpu_custom_call.1} parent=1 // pred_check
      _
    $region31: #{tpu_custom_call.1} parent=1 // pred_check_branch
      %69 = sbr.rel (0) target = $region33
    $region32: #{tpu_custom_call.1} parent=1 // pred_region
      %70 = dma.done [#allocation3], 128
    $region33: #{tpu_custom_call.1} parent=1 // pred_fallthru
      _
    // Predicated region
    $region34: #{tpu_custom_call.1} parent=1 // pred_check
      _
    $region35: #{tpu_custom_call.1} parent=1 // pred_check_branch
      %72 = sbr.rel (0) target = $region37
    $region36: #{tpu_custom_call.1} parent=1 // pred_region
      %73 = dma.done [#allocation6], 4096
    $region37: #{tpu_custom_call.1} parent=1 // pred_fallthru
      _
    // Predicated region
    $region38: #{tpu_custom_call.1} parent=1 // pred_check
      _
    $region39: #{tpu_custom_call.1} parent=1 // pred_check_branch
      %75 = sbr.rel (0) target = $region41
    $region40: #{tpu_custom_call.1} parent=1 // pred_region
      %76 = dma.done [#allocation6], 8192
    $region41: #{tpu_custom_call.1} parent=1 // pred_fallthru
      _
    // Predicated region
    $region42: #{tpu_custom_call.1} parent=1 // pred_check
      _
    $region43: #{tpu_custom_call.1} parent=1 // pred_check_branch
      %78 = sbr.rel (0) target = $region45
    $region44: #{tpu_custom_call.1} parent=1 // pred_region
      %79 = dma.done [#allocation9], 4096
    $region45: #{tpu_custom_call.1} parent=1 // pred_fallthru
      _
    %v80 = vld [vmem:[#allocation2] sm:$0xff]
    %v81 = vld [vmem:[#allocation5] sm:$0xff]
    %v82 = vld [vmem:[#allocation5 + $0x8] sm:$0xff]
    %v83 = vld [vmem:[#allocation5 + $0x10] sm:$0xff]
    %v84 = vld [vmem:[#allocation5 + $0x18] sm:$0xff]
    %v85 = vld [vmem:[#allocation5 + $0x20] sm:$0xff]
    %v86 = vld [vmem:[#allocation5 + $0x28] sm:$0xff]
    %v87 = vld [vmem:[#allocation5 + $0x30] sm:$0xff]
    %v88 = vld [vmem:[#allocation5 + $0x38] sm:$0xff]
    %v89 = vld [vmem:[#allocation5 + $0x40] sm:$0xff]
    %v90 = vld [vmem:[#allocation5 + $0x48] sm:$0xff]
    %v91 = vld [vmem:[#allocation5 + $0x50] sm:$0xff]
    %v92 = vld [vmem:[#allocation5 + $0x58] sm:$0xff]
    %v93 = vld [vmem:[#allocation5 + $0x60] sm:$0xff]
    %v94 = vld [vmem:[#allocation5 + $0x68] sm:$0xff]
    %v95 = vld [vmem:[#allocation5 + $0x70] sm:$0xff]
    %v96 = vld [vmem:[#allocation5 + $0x78] sm:$0xff]
    %v97 = vld [vmem:[#allocation5 + $0x80] sm:$0xff]
    %v98 = vld [vmem:[#allocation5 + $0x88] sm:$0xff]
    %v99 = vld [vmem:[#allocation5 + $0x90] sm:$0xff]
    %v100 = vld [vmem:[#allocation5 + $0x98] sm:$0xff]
    %v101 = vld [vmem:[#allocation5 + $0xa0] sm:$0xff]
    %v102 = vld [vmem:[#allocation5 + $0xa8] sm:$0xff]
    %v103 = vld [vmem:[#allocation5 + $0xb0] sm:$0xff]
    %v104 = vld [vmem:[#allocation5 + $0xb8] sm:$0xff]
    %v105 = vld [vmem:[#allocation5 + $0xc0] sm:$0xff]
    %v106 = vld [vmem:[#allocation5 + $0xc8] sm:$0xff]
    %v107 = vld [vmem:[#allocation5 + $0xd0] sm:$0xff]
    %v108 = vld [vmem:[#allocation5 + $0xd8] sm:$0xff]
    %v109 = vld [vmem:[#allocation5 + $0xe0] sm:$0xff]
    %v110 = vld [vmem:[#allocation5 + $0xe8] sm:$0xff]
    %v111 = vld [vmem:[#allocation5 + $0xf0] sm:$0xff]
    %v112 = vld [vmem:[#allocation5 + $0xf8] sm:$0xff]
    %v113 = vld [vmem:[%s2] sm:$0x3]
    %v115 = vlaneseq
    %v116 = vshrl.u32 %v115, 7
    %v117 = vsub.s32 0, %v116
    %v118 = vrot.slane %v113, %v117
    %v119 = vlaneseq
    %v120 = vshrl.u32 %v119, 7
    %v121 = vsub.s32 1, %v120
    %v122 = vrot.slane %v113, %v121
    %125 = vmatprep.subr.mxu0 %v82
    %126 = vmatpush1.msra.mxu0 %v81
    %127 = vmatprep.subr.mxu0 %v84
    %128 = vmatpush1.msra.mxu0 %v83
    %129 = vmatprep.subr.mxu0 %v86
    %130 = vmatpush1.msra.mxu0 %v85
    %131 = vmatprep.subr.mxu0 %v88
    %132 = vmatpush1.msra.mxu0 %v87
    %133 = vmatprep.subr.mxu0 %v90
    %134 = vmatpush1.msra.mxu0 %v89
    %135 = vmatprep.subr.mxu0 %v92
    %136 = vmatpush1.msra.mxu0 %v91
    %137 = vmatprep.subr.mxu0 %v94
    %138 = vmatpush1.msra.mxu0 %v93
    %139 = vmatprep.subr.mxu0 %v96
    %140 = vmatpush1.msra.mxu0 %v95
    %141 = vmatprep.subr.mxu0 %v98
    %142 = vmatpush1.msra.mxu0 %v97
    %143 = vmatprep.subr.mxu0 %v100
    %144 = vmatpush1.msra.mxu0 %v99
    %145 = vmatprep.subr.mxu0 %v102
    %146 = vmatpush1.msra.mxu0 %v101
    %147 = vmatprep.subr.mxu0 %v104
    %148 = vmatpush1.msra.mxu0 %v103
    %149 = vmatprep.subr.mxu0 %v106
    %150 = vmatpush1.msra.mxu0 %v105
    %151 = vmatprep.subr.mxu0 %v108
    %152 = vmatpush1.msra.mxu0 %v107
    %153 = vmatprep.subr.mxu0 %v110
    %154 = vmatpush1.msra.mxu0 %v109
    %155 = vmatprep.subr.mxu0 %v112
    %156 = vmatpush1.msra.mxu0 %v111
    %157 = vmatprep.subr.mxu0 0.0
    %158 = vmatpush1.msra.mxu0 0.0
    %159 = vmatprep.subr.mxu0 0.0
    %160 = vmatpush1.msra.mxu0 0.0
    %161 = vmatprep.subr.mxu0 0.0
    %162 = vmatpush1.msra.mxu0 0.0
    %163 = vmatprep.subr.mxu0 0.0
    %164 = vmatpush1.msra.mxu0 0.0
    %165 = vmatprep.subr.mxu0 0.0
    %166 = vmatpush1.msra.mxu0 0.0
    %167 = vmatprep.subr.mxu0 0.0
    %168 = vmatpush1.msra.mxu0 0.0
    %169 = vmatprep.subr.mxu0 0.0
    %170 = vmatpush1.msra.mxu0 0.0
    %171 = vmatprep.subr.mxu0 0.0
    %172 = vmatpush1.msra.mxu0 0.0
    %173 = vmatprep.subr.mxu0 0.0
    %174 = vmatpush1.msra.mxu0 0.0
    %175 = vmatprep.subr.mxu0 0.0
    %176 = vmatpush1.msra.mxu0 0.0
    %177 = vmatprep.subr.mxu0 0.0
    %178 = vmatpush1.msra.mxu0 0.0
    %179 = vmatprep.subr.mxu0 0.0
    %180 = vmatpush1.msra.mxu0 0.0
    %181 = vmatprep.subr.mxu0 0.0
    %182 = vmatpush1.msra.mxu0 0.0
    %183 = vmatprep.subr.mxu0 0.0
    %184 = vmatpush1.msra.mxu0 0.0
    %185 = vmatprep.subr.mxu0 0.0
    %186 = vmatpush1.msra.mxu0 0.0
    %187 = vmatprep.subr.mxu0 0.0
    %188 = vmatpush1.msra.mxu0 0.0
    %189 = vmatprep.mubr.f32.mxu0 0.0
    %190 = vmatmul.mubr.f32.gmra.mrb[0].mxu0 %v80
    %v191 = vpop.f32.mrb[0].mxu0
    %v192 = vadd.f32 %v118, %v191
    %v193 = vpop.f32.mrb[0].mxu0
    %v194 = vadd.f32 %v122, %v193
    %195 = vdwg.mxu0
    %v196 = vmax.f32 %v192, 0.0
    %v197 = vmax.f32 %v194, 0.0
    %v198 = vld [vmem:[#allocation7] sm:$0xff]
    %v199 = vld [vmem:[#allocation7 + $0x8] sm:$0xff]
    %v200 = vld [vmem:[#allocation7 + $0x10] sm:$0xff]
    %v201 = vld [vmem:[#allocation7 + $0x18] sm:$0xff]
    %v202 = vld [vmem:[#allocation7 + $0x20] sm:$0xff]
    %v203 = vld [vmem:[#allocation7 + $0x28] sm:$0xff]
    %v204 = vld [vmem:[#allocation7 + $0x30] sm:$0xff]
    %v205 = vld [vmem:[#allocation7 + $0x38] sm:$0xff]
    %v206 = vld [vmem:[#allocation7 + $0x40] sm:$0xff]
    %v207 = vld [vmem:[#allocation7 + $0x48] sm:$0xff]
    %v208 = vld [vmem:[#allocation7 + $0x50] sm:$0xff]
    %v209 = vld [vmem:[#allocation7 + $0x58] sm:$0xff]
    %v210 = vld [vmem:[#allocation7 + $0x60] sm:$0xff]
    %v211 = vld [vmem:[#allocation7 + $0x68] sm:$0xff]
    %v212 = vld [vmem:[#allocation7 + $0x70] sm:$0xff]
    %v213 = vld [vmem:[#allocation7 + $0x78] sm:$0xff]
    %v214 = vld [vmem:[#allocation7 + $0x80] sm:$0xff]
    %v215 = vld [vmem:[#allocation7 + $0x88] sm:$0xff]
    %v216 = vld [vmem:[#allocation7 + $0x90] sm:$0xff]
    %v217 = vld [vmem:[#allocation7 + $0x98] sm:$0xff]
    %v218 = vld [vmem:[#allocation7 + $0xa0] sm:$0xff]
    %v219 = vld [vmem:[#allocation7 + $0xa8] sm:$0xff]
    %v220 = vld [vmem:[#allocation7 + $0xb0] sm:$0xff]
    %v221 = vld [vmem:[#allocation7 + $0xb8] sm:$0xff]
    %v222 = vld [vmem:[#allocation7 + $0xc0] sm:$0xff]
    %v223 = vld [vmem:[#allocation7 + $0xc8] sm:$0xff]
    %v224 = vld [vmem:[#allocation7 + $0xd0] sm:$0xff]
    %v225 = vld [vmem:[#allocation7 + $0xd8] sm:$0xff]
    %v226 = vld [vmem:[#allocation7 + $0xe0] sm:$0xff]
    %v227 = vld [vmem:[#allocation7 + $0xe8] sm:$0xff]
    %v228 = vld [vmem:[#allocation7 + $0xf0] sm:$0xff]
    %v229 = vld [vmem:[#allocation7 + $0xf8] sm:$0xff]
    %v230 = vld [vmem:[#allocation7 + $0x100] sm:$0xff]
    %v231 = vld [vmem:[#allocation7 + $0x108] sm:$0xff]
    %v232 = vld [vmem:[#allocation7 + $0x110] sm:$0xff]
    %v233 = vld [vmem:[#allocation7 + $0x118] sm:$0xff]
    %v234 = vld [vmem:[#allocation7 + $0x120] sm:$0xff]
    %v235 = vld [vmem:[#allocation7 + $0x128] sm:$0xff]
    %v236 = vld [vmem:[#allocation7 + $0x130] sm:$0xff]
    %v237 = vld [vmem:[#allocation7 + $0x138] sm:$0xff]
    %v238 = vld [vmem:[#allocation7 + $0x140] sm:$0xff]
    %v239 = vld [vmem:[#allocation7 + $0x148] sm:$0xff]
    %v240 = vld [vmem:[#allocation7 + $0x150] sm:$0xff]
    %v241 = vld [vmem:[#allocation7 + $0x158] sm:$0xff]
    %v242 = vld [vmem:[#allocation7 + $0x160] sm:$0xff]
    %v243 = vld [vmem:[#allocation7 + $0x168] sm:$0xff]
    %v244 = vld [vmem:[#allocation7 + $0x170] sm:$0xff]
    %v245 = vld [vmem:[#allocation7 + $0x178] sm:$0xff]
    %v246 = vld [vmem:[#allocation7 + $0x180] sm:$0xff]
    %v247 = vld [vmem:[#allocation7 + $0x188] sm:$0xff]
    %v248 = vld [vmem:[#allocation7 + $0x190] sm:$0xff]
    %v249 = vld [vmem:[#allocation7 + $0x198] sm:$0xff]
    %v250 = vld [vmem:[#allocation7 + $0x1a0] sm:$0xff]
    %v251 = vld [vmem:[#allocation7 + $0x1a8] sm:$0xff]
    %v252 = vld [vmem:[#allocation7 + $0x1b0] sm:$0xff]
    %v253 = vld [vmem:[#allocation7 + $0x1b8] sm:$0xff]
    %v254 = vld [vmem:[#allocation7 + $0x1c0] sm:$0xff]
    %v255 = vld [vmem:[#allocation7 + $0x1c8] sm:$0xff]
    %v256 = vld [vmem:[#allocation7 + $0x1d0] sm:$0xff]
    %v257 = vld [vmem:[#allocation7 + $0x1d8] sm:$0xff]
    %v258 = vld [vmem:[#allocation7 + $0x1e0] sm:$0xff]
    %v259 = vld [vmem:[#allocation7 + $0x1e8] sm:$0xff]
    %v260 = vld [vmem:[#allocation7 + $0x1f0] sm:$0xff]
    %v261 = vld [vmem:[#allocation7 + $0x1f8] sm:$0xff]
    %v262 = vld [vmem:[%s4] sm:$0x3]
    %v264 = vlaneseq
    %v265 = vshrl.u32 %v264, 7
    %v266 = vsub.s32 0, %v265
    %v267 = vrot.slane %v262, %v266
    %v268 = vlaneseq
    %v269 = vshrl.u32 %v268, 7
    %v270 = vsub.s32 1, %v269
    %v271 = vrot.slane %v262, %v270
    %274 = vmatprep.subr.mxu0 %v199
    %275 = vmatpush1.msra.mxu0 %v198
    %276 = vmatprep.subr.mxu0 %v201
    %277 = vmatpush1.msra.mxu0 %v200
    %278 = vmatprep.subr.mxu0 %v203
    %279 = vmatpush1.msra.mxu0 %v202
    %280 = vmatprep.subr.mxu0 %v205
    %281 = vmatpush1.msra.mxu0 %v204
    %282 = vmatprep.subr.mxu0 %v207
    %283 = vmatpush1.msra.mxu0 %v206
    %284 = vmatprep.subr.mxu0 %v209
    %285 = vmatpush1.msra.mxu0 %v208
    %286 = vmatprep.subr.mxu0 %v211
    %287 = vmatpush1.msra.mxu0 %v210
    %288 = vmatprep.subr.mxu0 %v213
    %289 = vmatpush1.msra.mxu0 %v212
    %290 = vmatprep.subr.mxu0 %v215
    %291 = vmatpush1.msra.mxu0 %v214
    %292 = vmatprep.subr.mxu0 %v217
    %293 = vmatpush1.msra.mxu0 %v216
    %294 = vmatprep.subr.mxu0 %v219
    %295 = vmatpush1.msra.mxu0 %v218
    %296 = vmatprep.subr.mxu0 %v221
    %297 = vmatpush1.msra.mxu0 %v220
    %298 = vmatprep.subr.mxu0 %v223
    %299 = vmatpush1.msra.mxu0 %v222
    %300 = vmatprep.subr.mxu0 %v225
    %301 = vmatpush1.msra.mxu0 %v224
    %302 = vmatprep.subr.mxu0 %v227
    %303 = vmatpush1.msra.mxu0 %v226
    %304 = vmatprep.subr.mxu0 %v229
    %305 = vmatpush1.msra.mxu0 %v228
    %306 = vmatprep.subr.mxu0 %v231
    %307 = vmatpush1.msra.mxu0 %v230
    %308 = vmatprep.subr.mxu0 %v233
    %309 = vmatpush1.msra.mxu0 %v232
    %310 = vmatprep.subr.mxu0 %v235
    %311 = vmatpush1.msra.mxu0 %v234
    %312 = vmatprep.subr.mxu0 %v237
    %313 = vmatpush1.msra.mxu0 %v236
    %314 = vmatprep.subr.mxu0 %v239
    %315 = vmatpush1.msra.mxu0 %v238
    %316 = vmatprep.subr.mxu0 %v241
    %317 = vmatpush1.msra.mxu0 %v240
    %318 = vmatprep.subr.mxu0 %v243
    %319 = vmatpush1.msra.mxu0 %v242
    %320 = vmatprep.subr.mxu0 %v245
    %321 = vmatpush1.msra.mxu0 %v244
    %322 = vmatprep.subr.mxu0 %v247
    %323 = vmatpush1.msra.mxu0 %v246
    %324 = vmatprep.subr.mxu0 %v249
    %325 = vmatpush1.msra.mxu0 %v248
    %326 = vmatprep.subr.mxu0 %v251
    %327 = vmatpush1.msra.mxu0 %v250
    %328 = vmatprep.subr.mxu0 %v253
    %329 = vmatpush1.msra.mxu0 %v252
    %330 = vmatprep.subr.mxu0 %v255
    %331 = vmatpush1.msra.mxu0 %v254
    %332 = vmatprep.subr.mxu0 %v257
    %333 = vmatpush1.msra.mxu0 %v256
    %334 = vmatprep.subr.mxu0 %v259
    %335 = vmatpush1.msra.mxu0 %v258
    %336 = vmatprep.subr.mxu0 %v261
    %337 = vmatpush1.msra.mxu0 %v260
    %338 = vmatprep.mubr.f32.mxu0 %v197
    %339 = vmatmul.mubr.f32.gmra.mrb[0].mxu0 %v196
    %v340 = vpop.f32.mrb[0].mxu0
    %v341 = vadd.f32 %v267, %v340
    %v342 = vpop.f32.mrb[0].mxu0
    %v343 = vadd.f32 %v271, %v342
    %344 = vdwg.mxu0
    %v345 = vmax.f32 %v341, 0.0
    %v346 = vmax.f32 %v343, 0.0
    %v347 = vld [vmem:[#allocation8] sm:$0xff]
    %v348 = vld [vmem:[#allocation8 + $0x8] sm:$0xff]
    %v349 = vld [vmem:[#allocation8 + $0x10] sm:$0xff]
    %v350 = vld [vmem:[#allocation8 + $0x18] sm:$0xff]
    %v351 = vld [vmem:[#allocation8 + $0x20] sm:$0xff]
    %v352 = vld [vmem:[#allocation8 + $0x28] sm:$0xff]
    %v353 = vld [vmem:[#allocation8 + $0x30] sm:$0xff]
    %v354 = vld [vmem:[#allocation8 + $0x38] sm:$0xff]
    %v355 = vld [vmem:[#allocation8 + $0x40] sm:$0xff]
    %v356 = vld [vmem:[#allocation8 + $0x48] sm:$0xff]
    %v357 = vld [vmem:[#allocation8 + $0x50] sm:$0xff]
    %v358 = vld [vmem:[#allocation8 + $0x58] sm:$0xff]
    %v359 = vld [vmem:[#allocation8 + $0x60] sm:$0xff]
    %v360 = vld [vmem:[#allocation8 + $0x68] sm:$0xff]
    %v361 = vld [vmem:[#allocation8 + $0x70] sm:$0xff]
    %v362 = vld [vmem:[#allocation8 + $0x78] sm:$0xff]
    %v363 = vld [vmem:[#allocation8 + $0x80] sm:$0xff]
    %v364 = vld [vmem:[#allocation8 + $0x88] sm:$0xff]
    %v365 = vld [vmem:[#allocation8 + $0x90] sm:$0xff]
    %v366 = vld [vmem:[#allocation8 + $0x98] sm:$0xff]
    %v367 = vld [vmem:[#allocation8 + $0xa0] sm:$0xff]
    %v368 = vld [vmem:[#allocation8 + $0xa8] sm:$0xff]
    %v369 = vld [vmem:[#allocation8 + $0xb0] sm:$0xff]
    %v370 = vld [vmem:[#allocation8 + $0xb8] sm:$0xff]
    %v371 = vld [vmem:[#allocation8 + $0xc0] sm:$0xff]
    %v372 = vld [vmem:[#allocation8 + $0xc8] sm:$0xff]
    %v373 = vld [vmem:[#allocation8 + $0xd0] sm:$0xff]
    %v374 = vld [vmem:[#allocation8 + $0xd8] sm:$0xff]
    %v375 = vld [vmem:[#allocation8 + $0xe0] sm:$0xff]
    %v376 = vld [vmem:[#allocation8 + $0xe8] sm:$0xff]
    %v377 = vld [vmem:[#allocation8 + $0xf0] sm:$0xff]
    %v378 = vld [vmem:[#allocation8 + $0xf8] sm:$0xff]
    %v379 = vld [vmem:[%s6] sm:$0x1]
    %v381 = vlaneseq
    %v382 = vshrl.u32 %v381, 7
    %v383 = vsub.s32 0, %v382
    %v384 = vrot.slane %v379, %v383
    %386 = vmatprep.subr.mxu0 0.0
    %387 = vmatpush1.msra.mxu0 %v347
    %388 = vmatprep.subr.mxu0 0.0
    %389 = vmatpush1.msra.mxu0 %v348
    %390 = vmatprep.subr.mxu0 0.0
    %391 = vmatpush1.msra.mxu0 %v349
    %392 = vmatprep.subr.mxu0 0.0
    %393 = vmatpush1.msra.mxu0 %v350
    %394 = vmatprep.subr.mxu0 0.0
    %395 = vmatpush1.msra.mxu0 %v351
    %396 = vmatprep.subr.mxu0 0.0
    %397 = vmatpush1.msra.mxu0 %v352
    %398 = vmatprep.subr.mxu0 0.0
    %399 = vmatpush1.msra.mxu0 %v353
    %400 = vmatprep.subr.mxu0 0.0
    %401 = vmatpush1.msra.mxu0 %v354
    %402 = vmatprep.subr.mxu0 0.0
    %403 = vmatpush1.msra.mxu0 %v355
    %404 = vmatprep.subr.mxu0 0.0
    %405 = vmatpush1.msra.mxu0 %v356
    %406 = vmatprep.subr.mxu0 0.0
    %407 = vmatpush1.msra.mxu0 %v357
    %408 = vmatprep.subr.mxu0 0.0
    %409 = vmatpush1.msra.mxu0 %v358
    %410 = vmatprep.subr.mxu0 0.0
    %411 = vmatpush1.msra.mxu0 %v359
    %412 = vmatprep.subr.mxu0 0.0
    %413 = vmatpush1.msra.mxu0 %v360
    %414 = vmatprep.subr.mxu0 0.0
    %415 = vmatpush1.msra.mxu0 %v361
    %416 = vmatprep.subr.mxu0 0.0
    %417 = vmatpush1.msra.mxu0 %v362
    %418 = vmatprep.subr.mxu0 0.0
    %419 = vmatpush1.msra.mxu0 %v363
    %420 = vmatprep.subr.mxu0 0.0
    %421 = vmatpush1.msra.mxu0 %v364
    %422 = vmatprep.subr.mxu0 0.0
    %423 = vmatpush1.msra.mxu0 %v365
    %424 = vmatprep.subr.mxu0 0.0
    %425 = vmatpush1.msra.mxu0 %v366
    %426 = vmatprep.subr.mxu0 0.0
    %427 = vmatpush1.msra.mxu0 %v367
    %428 = vmatprep.subr.mxu0 0.0
    %429 = vmatpush1.msra.mxu0 %v368
    %430 = vmatprep.subr.mxu0 0.0
    %431 = vmatpush1.msra.mxu0 %v369
    %432 = vmatprep.subr.mxu0 0.0
    %433 = vmatpush1.msra.mxu0 %v370
    %434 = vmatprep.subr.mxu0 0.0
    %435 = vmatpush1.msra.mxu0 %v371
    %436 = vmatprep.subr.mxu0 0.0
    %437 = vmatpush1.msra.mxu0 %v372
    %438 = vmatprep.subr.mxu0 0.0
    %439 = vmatpush1.msra.mxu0 %v373
    %440 = vmatprep.subr.mxu0 0.0
    %441 = vmatpush1.msra.mxu0 %v374
    %442 = vmatprep.subr.mxu0 0.0
    %443 = vmatpush1.msra.mxu0 %v375
    %444 = vmatprep.subr.mxu0 0.0
    %445 = vmatpush1.msra.mxu0 %v376
    %446 = vmatprep.subr.mxu0 0.0
    %447 = vmatpush1.msra.mxu0 %v377
    %448 = vmatprep.subr.mxu0 0.0
    %449 = vmatpush1.msra.mxu0 %v378
    %450 = vmatprep.mubr.f32.mxu0 %v346
    %451 = vmatmul.mubr.f32.gmra.mrb[0].mxu0 %v345
    %v452 = vpop.f32.mrb[0].mxu0
    %v453 = vadd.f32 %v384, %v452
    %v454 = vpop.f32.mrb[0].mxu0
    %455 = vdwg.mxu0
    %v456 = vxor.u32 %v453, 2147483648
    %v457 = vmul.f32 %v456, 1.442695
    %v458 = vpow.pop %v457
    %v459 = vadd.f32 %v458, 1.0
    %v460 = vrcp.pop %v459
    %v461 = vmul.f32 1.0, %v460
    %462 = vst [vmem:[#allocation10] sm:$0xff] %v461
    // Predicated region
    $region46: #{tpu_custom_call.1} parent=1 // pred_check
      _
    $region47: #{tpu_custom_call.1} parent=1 // pred_check_branch
      %464 = sbr.rel (0) target = $region49
    $region48: #{tpu_custom_call.1} parent=1 // pred_region
      %s466 = ssub.s32 128, 128
      %467 = vsyncadd [#allocation4], %s466
      %s469 = sshll.u32 [#allocation10], 4
      %s470 = int_to_ptr.vmem [resolvable:$true] %s469
      %472 = dma.vmem_to_hbm [thread:$0]  %s470, 128, %s7, [#allocation4]
    $region49: #{tpu_custom_call.1} parent=1 // pred_fallthru
      _
    // Predicated region
    $region50: #{tpu_custom_call.1} parent=1 // pred_check
      _
    $region51: #{tpu_custom_call.1} parent=1 // pred_check_branch
      %474 = sbr.rel (0) target = $region53
    $region52: #{tpu_custom_call.1} parent=1 // pred_region
      %475 = dma.done [#allocation4], 128
    $region53: #{tpu_custom_call.1} parent=1 // pred_fallthru
      _
    %476 = vsyncpa [#allocation3], 1
    %477 = vsyncpa [#allocation6], 1
    %478 = vsyncpa [#allocation9], 1
    %479 = vsyncpa [#allocation4], 1

</llo_original>
